<compile_context>
chip_gen: v7x
topology: tpu7x:2x2x1
jax: 0.10.0
libtpu: 0.0.40
codegen_flags: <defaults>
</compile_context>

<pallas_src>
import numpy as np

import jax
import jax.numpy as jnp
from jax.experimental import pallas as pl
from jax.experimental.pallas import tpu as pltpu

MIN_FEATURE_VALUE = -6.0
MAX_FEATURE_VALUE = 6.0

_LANES = 128
_ROW_QUANT = 1024        # tile granularity when tiling: keeps every packed block's
                         # sublane count a multiple of 8 for any fold factor <= 128
_TILE_B_MAX = 16384      # rows/step upper bound (amortizes ~0.35 us per-step cost)
_MIN_STEPS = 4           # when tiling: >= 4 steps (pipeline) and even (v7x dual-TC)
_VMEM_BUDGET = 24 << 20  # double-buffered working-set target: under v7x's 32 MiB
                         # default scoped limit, far under v5e/v6e's 128 MiB VMEM


def _cdiv(a, b):
    return -(-a // b)


def _round_up(x, m):
    return _cdiv(x, m) * m


def _fold_for(batch, d):
    """#batch rows folded into one 128-lane row (1 => direct (B, d) layout)."""
    if d <= _LANES and _LANES % d == 0:
        fold = _LANES // d
        if fold > 1 and batch % fold == 0:
            return fold
    return 1


def _pack_data(x, presence, fold):
    """Zero-copy lane-dense packing (free row-major reshape) or direct passthrough."""
    b, _ = x.shape
    xf = x.astype(jnp.float32)
    # bool -> int8 keeps presence at 1 B/elem with a known-good lowering; other
    # dtypes (e.g. float32 presence) pass through raw and are compared `!= 0`
    # in-kernel, avoiding a wrapper-side convert that re-reads/re-writes HBM.
    pf = presence.astype(jnp.int8) if presence.dtype == jnp.bool_ else presence
    if fold > 1:
        return xf.reshape(b // fold, _LANES), pf.reshape(b // fold, _LANES)
    return xf, pf


def _pack_params(mean, stddev, fold):
    """(1, W) mean/std rows matching the data layout (tiled once per Preprocessor)."""
    d = mean.shape[-1]
    mean_row = mean.astype(jnp.float32).reshape(1, d)
    std_row = stddev.astype(jnp.float32).reshape(1, d)
    if fold > 1:
        mean_row = jnp.tile(mean_row, (1, fold))
        std_row = jnp.tile(std_row, (1, fold))
    return mean_row, std_row


def _choose_tile_b(batch, bytes_per_row, max_tile_b=None):
    """Batch rows processed per grid step."""
    limit = _TILE_B_MAX if max_tile_b is None else max_tile_b
    cap = _VMEM_BUDGET // max(1, 2 * bytes_per_row)            # 2x: double-buffered
    tile = max(_ROW_QUANT, min(limit, (cap // _ROW_QUANT) * _ROW_QUANT))
    if batch <= tile and batch <= _MIN_STEPS * _ROW_QUANT:
        return batch      # small batch: single step, every block == full array
    steps = max(_MIN_STEPS, _cdiv(batch, tile))
    if steps % 2:
        steps += 1        # even step count so both v7x TensorCores get equal work
    return _round_up(_cdiv(batch, steps), _ROW_QUANT)


def _fused_preprocess_kernel(sx_ref, sp_ref, nsx_ref, nsp_ref,
                             ax_ref, ap_ref, nax_ref, nap_ref,
                             s_mean_ref, s_std_ref, a_mean_ref, a_std_ref,
                             so_ref, nso_ref, ao_ref, nao_ref):
    """Normalize + clamp + presence-mask all four feature groups in one body."""
    # Load each (1, W) parameter row once; reused by both members of its pair.
    s_mean, s_std = s_mean_ref[...], s_std_ref[...]
    a_mean, a_std = a_mean_ref[...], a_std_ref[...]

    def _prep(x_ref, p_ref, mean, std, o_ref):
        y = jnp.clip((x_ref[...] - mean) / std, MIN_FEATURE_VALUE, MAX_FEATURE_VALUE)
        # `where` (not multiply) so NaNs sitting in absent slots are zeroed.
        o_ref[...] = jnp.where(p_ref[...] != 0, y, 0.0).astype(o_ref.dtype)

    _prep(sx_ref, sp_ref, s_mean, s_std, so_ref)
    _prep(nsx_ref, nsp_ref, s_mean, s_std, nso_ref)
    _prep(ax_ref, ap_ref, a_mean, a_std, ao_ref)
    _prep(nax_ref, nap_ref, a_mean, a_std, nao_ref)


def fused_preprocess(state, state_p, next_state, next_state_p,
                     action, action_p, next_action, next_action_p,
                     state_params, action_params, *,
                     out_dtype=jnp.float32, alias_inputs=False, max_tile_b=None):
    """Single pallas_call applying both Preprocessors to all four feature groups."""
    B, s_dim = state.shape
    _, a_dim = action.shape

    fold_s = _fold_for(B, s_dim)
    fold_a = _fold_for(B, a_dim)

    sx, sp = _pack_data(state, state_p, fold_s)
    nsx, nsp = _pack_data(next_state, next_state_p, fold_s)
    ax, ap = _pack_data(action, action_p, fold_a)
    nax, nap = _pack_data(next_action, next_action_p, fold_a)
    s_mean_row, s_std_row = _pack_params(*state_params, fold_s)
    a_mean_row, a_std_row = _pack_params(*action_params, fold_a)

    out_isz = np.dtype(out_dtype).itemsize
    bytes_per_row = sum(
        d * (4 + p.dtype.itemsize + out_isz)
        for d, p in ((s_dim, sp), (s_dim, nsp), (a_dim, ap), (a_dim, nap)))

    tile_b = _choose_tile_b(B, bytes_per_row, max_tile_b)
    grid = (_cdiv(B, tile_b),)

    def data_spec(fold, d):
        if fold > 1:
            return pl.BlockSpec((tile_b // fold, _LANES), lambda i: (i, 0))
        return pl.BlockSpec((tile_b, d), lambda i: (i, 0))

    def param_spec(row):
        return pl.BlockSpec((1, row.shape[1]), lambda i: (0, 0))

    in_specs = [
        data_spec(fold_s, s_dim), data_spec(fold_s, s_dim),   # state x / presence
        data_spec(fold_s, s_dim), data_spec(fold_s, s_dim),   # next_state
        data_spec(fold_a, a_dim), data_spec(fold_a, a_dim),   # action
        data_spec(fold_a, a_dim), data_spec(fold_a, a_dim),   # next_action
        param_spec(s_mean_row), param_spec(s_std_row),
        param_spec(a_mean_row), param_spec(a_std_row),
    ]
    out_specs = (data_spec(fold_s, s_dim), data_spec(fold_s, s_dim),
                 data_spec(fold_a, a_dim), data_spec(fold_a, a_dim))
    out_shape = (jax.ShapeDtypeStruct(sx.shape, out_dtype),
                 jax.ShapeDtypeStruct(nsx.shape, out_dtype),
                 jax.ShapeDtypeStruct(ax.shape, out_dtype),
                 jax.ShapeDtypeStruct(nax.shape, out_dtype))

    # Explicit scoped-VMEM limit: the double-buffered working set can exceed
    # v5e's 16 MiB default; 32 MiB covers the ~24 MiB budget on every generation.
    vmem_limit = int(min(48 << 20,
                         max(32 << 20, 2 * tile_b * bytes_per_row + (4 << 20))))

    aliases = {}
    if alias_inputs and jnp.dtype(out_dtype) == jnp.dtype(jnp.float32):
        aliases = {0: 0, 2: 1, 4: 2, 6: 3}   # only if the x inputs are dead afterwards

    so, nso, ao, nao = pl.pallas_call(
        _fused_preprocess_kernel,
        out_shape=out_shape,
        grid=grid,
        in_specs=in_specs,
        out_specs=out_specs,
        input_output_aliases=aliases,
        compiler_params=pltpu.CompilerParams(
            dimension_semantics=("parallel",),
            vmem_limit_bytes=vmem_limit),
    )(sx, sp, nsx, nsp, ax, ap, nax, nap,
      s_mean_row, s_std_row, a_mean_row, a_std_row)

    def unpack(y, fold, d):
        return y.reshape(B, d) if fold > 1 else y   # free reshape; no slicing/copy

    return (unpack(so, fold_s, s_dim), unpack(nso, fold_s, s_dim),
            unpack(ao, fold_a, a_dim), unpack(nao, fold_a, a_dim))


def policy_network_batch_preprocessor(batch, state_params, action_params, *,
                                      out_dtype=jnp.float32, max_tile_b=None):
    """Forward pass of PolicyNetworkBatchPreprocessor (dict mirroring
    rlt.PolicyNetworkInput).  batch_to_device is a no-op on the TPU backend."""
    prep_state, prep_next_state, prep_action, prep_next_action = fused_preprocess(
        batch["state_features"], batch["state_features_presence"],
        batch["next_state_features"], batch["next_state_features_presence"],
        batch["action"], batch["action_presence"],
        batch["next_action"], batch["next_action_presence"],
        state_params, action_params,
        out_dtype=out_dtype, max_tile_b=max_tile_b,
    )

    unsq = lambda v: v.reshape(v.shape[0], 1)   # torch .unsqueeze(1): plain JAX glue

    return {
        "state": prep_state,
        "next_state": prep_next_state,
        "action": prep_action,
        "next_action": prep_next_action,
        "reward": unsq(batch["reward"]),
        "time_diff": unsq(batch["time_diff"]),
        "step": unsq(batch["step"]),
        "not_terminal": unsq(batch["not_terminal"]),
        "extras": {
            "mdp_id": unsq(batch["mdp_id"]),
            "sequence_number": unsq(batch["sequence_number"]),
            "action_probability": unsq(batch["action_probability"]),
        },
    }


if __name__ == "__main__":
    STATE_DIM = 32
    ACTION_DIM = 8

    # Deterministic synthetic normalization parameters (Preprocessor init).
    s_mean = jnp.arange(STATE_DIM, dtype=jnp.float32) * 0.05
    s_std = 1.0 + jnp.arange(STATE_DIM, dtype=jnp.float32) * 0.1
    a_mean = jnp.arange(ACTION_DIM, dtype=jnp.float32) * 0.02
    a_std = 0.5 + jnp.arange(ACTION_DIM, dtype=jnp.float32) * 0.25

    def make_batch(B, key, presence_dtype=jnp.bool_):
        keys = jax.random.split(key, 10)

        def pres(k, shape, thresh):
            p = jax.random.uniform(k, shape) > thresh
            return p if presence_dtype == jnp.bool_ else p.astype(presence_dtype)

        return {
            "state_features": jax.random.normal(keys[0], (B, STATE_DIM), jnp.float32) * 3.0,
            "state_features_presence": pres(keys[1], (B, STATE_DIM), 0.2),
            "next_state_features": jax.random.normal(keys[2], (B, STATE_DIM), jnp.float32) * 3.0,
            "next_state_features_presence": pres(keys[3], (B, STATE_DIM), 0.2),
            "action": jax.random.normal(keys[4], (B, ACTION_DIM), jnp.float32),
            "action_presence": pres(keys[5], (B, ACTION_DIM), 0.1),
            "next_action": jax.random.normal(keys[6], (B, ACTION_DIM), jnp.float32),
            "next_action_presence": pres(keys[7], (B, ACTION_DIM), 0.1),
            "reward": jax.random.normal(keys[8], (B,), jnp.float32),
            "time_diff": jnp.ones((B,), jnp.float32),
            "step": jnp.arange(B, dtype=jnp.float32),
            "not_terminal": jnp.ones((B,), jnp.float32),
            "mdp_id": jnp.arange(B, dtype=jnp.int32),
            "sequence_number": jnp.arange(B, dtype=jnp.int32),
            "action_probability": jax.random.uniform(keys[9], (B,), jnp.float32),
        }

    def ref_prep(x, p, m, s):
        y = jnp.clip((x - m) / s, MIN_FEATURE_VALUE, MAX_FEATURE_VALUE)
        return jnp.where(p != 0, y, 0.0)

    # Case 1: B=16, bool presence  -> lane-dense packed path, single grid step.
    # Case 2: B=10, bool presence  -> fold-unaligned, direct (B, D) path (no padding).
    # Case 3: B=3000, float32 presence, small tile override -> multi-step grid with
    #         partial final blocks, packed state + direct action, `!= 0` float path.
    cases = [
        (16, jnp.bool_, None),
        (10, jnp.bool_, None),
        (3000, jnp.float32, 1024),
    ]

    for B, p_dtype, tile_override in cases:
        batch = make_batch(B, jax.random.PRNGKey(0), presence_dtype=p_dtype)
        out = policy_network_batch_preprocessor(
            batch, (s_mean, s_std), (a_mean, a_std), max_tile_b=tile_override)
        jax.block_until_ready(out)

        ref_state = ref_prep(batch["state_features"], batch["state_features_presence"], s_mean, s_std)
        ref_next_state = ref_prep(batch["next_state_features"], batch["next_state_features_presence"], s_mean, s_std)
        ref_action = ref_prep(batch["action"], batch["action_presence"], a_mean, a_std)
        ref_next_action = ref_prep(batch["next_action"], batch["next_action_presence"], a_mean, a_std)

        assert out["state"].shape == (B, STATE_DIM) and out["state"].dtype == jnp.float32
        assert out["action"].shape == (B, ACTION_DIM)
        assert jnp.allclose(out["state"], ref_state, atol=1e-5, rtol=1e-5)
        assert jnp.allclose(out["next_state"], ref_next_state, atol=1e-5, rtol=1e-5)
        assert jnp.allclose(out["action"], ref_action, atol=1e-5, rtol=1e-5)
        assert jnp.allclose(out["next_action"], ref_next_action, atol=1e-5, rtol=1e-5)
        assert out["reward"].shape == (B, 1)
        assert out["not_terminal"].shape == (B, 1)
        assert out["extras"]["mdp_id"].shape == (B, 1)
        assert out["extras"]["action_probability"].shape == (B, 1)

    print("KERNEL_OK")
</pallas_src>

<mosaic_0001>
module attributes {stable_mosaic.version = 11 : i64} {
  func.func @_fused_preprocess_kernel(%arg0: i32, %arg1: memref<4x128xf32, #tpu.memory_space<vmem>>, %arg2: memref<4x128xi8, #tpu.memory_space<vmem>>, %arg3: memref<4x128xf32, #tpu.memory_space<vmem>>, %arg4: memref<4x128xi8, #tpu.memory_space<vmem>>, %arg5: memref<1x128xf32, #tpu.memory_space<vmem>>, %arg6: memref<1x128xi8, #tpu.memory_space<vmem>>, %arg7: memref<1x128xf32, #tpu.memory_space<vmem>>, %arg8: memref<1x128xi8, #tpu.memory_space<vmem>>, %arg9: memref<1x128xf32, #tpu.memory_space<vmem>>, %arg10: memref<1x128xf32, #tpu.memory_space<vmem>>, %arg11: memref<1x128xf32, #tpu.memory_space<vmem>>, %arg12: memref<1x128xf32, #tpu.memory_space<vmem>>, %arg13: memref<4x128xf32, #tpu.memory_space<vmem>>, %arg14: memref<4x128xf32, #tpu.memory_space<vmem>>, %arg15: memref<1x128xf32, #tpu.memory_space<vmem>>, %arg16: memref<1x128xf32, #tpu.memory_space<vmem>>) attributes {dimension_semantics = [#tpu.dimension_semantics<parallel>], iteration_bounds = array<i64: 1>, scalar_prefetch = 0 : i64, scratch_operands = 0 : i64, tpu.core_type = #tpu.core_type<tc>, window_params = [{transform_indices = @transform_0, window_bounds = array<i64: 4, 128>}, {transform_indices = @transform_1, window_bounds = array<i64: 4, 128>}, {transform_indices = @transform_2, window_bounds = array<i64: 4, 128>}, {transform_indices = @transform_3, window_bounds = array<i64: 4, 128>}, {transform_indices = @transform_4, window_bounds = array<i64: 1, 128>}, {transform_indices = @transform_5, window_bounds = array<i64: 1, 128>}, {transform_indices = @transform_6, window_bounds = array<i64: 1, 128>}, {transform_indices = @transform_7, window_bounds = array<i64: 1, 128>}, {pipeline_mode = #tpu.pipeline_mode<synchronous>, transform_indices = @transform_8, window_bounds = array<i64: 1, 128>}, {pipeline_mode = #tpu.pipeline_mode<synchronous>, transform_indices = @transform_9, window_bounds = array<i64: 1, 128>}, {pipeline_mode = #tpu.pipeline_mode<synchronous>, transform_indices = @transform_10, window_bounds = array<i64: 1, 128>}, {pipeline_mode = #tpu.pipeline_mode<synchronous>, transform_indices = @transform_11, window_bounds = array<i64: 1, 128>}, {transform_indices = @transform_12, window_bounds = array<i64: 4, 128>}, {transform_indices = @transform_13, window_bounds = array<i64: 4, 128>}, {transform_indices = @transform_14, window_bounds = array<i64: 1, 128>}, {transform_indices = @transform_15, window_bounds = array<i64: 1, 128>}]} {
    %c0 = arith.constant 0 : index
    %c0_0 = arith.constant 0 : index
    %0 = vector.load %arg9[%c0, %c0_0] : memref<1x128xf32, #tpu.memory_space<vmem>>, vector<1x128xf32>
    %c0_1 = arith.constant 0 : index
    %c0_2 = arith.constant 0 : index
    %1 = vector.load %arg10[%c0_1, %c0_2] : memref<1x128xf32, #tpu.memory_space<vmem>>, vector<1x128xf32>
    %c0_3 = arith.constant 0 : index
    %c0_4 = arith.constant 0 : index
    %2 = vector.load %arg11[%c0_3, %c0_4] : memref<1x128xf32, #tpu.memory_space<vmem>>, vector<1x128xf32>
    %c0_5 = arith.constant 0 : index
    %c0_6 = arith.constant 0 : index
    %3 = vector.load %arg12[%c0_5, %c0_6] : memref<1x128xf32, #tpu.memory_space<vmem>>, vector<1x128xf32>
    %c0_7 = arith.constant 0 : index
    %c0_8 = arith.constant 0 : index
    %4 = vector.load %arg1[%c0_7, %c0_8] : memref<4x128xf32, #tpu.memory_space<vmem>>, vector<4x128xf32>
    %5 = vector.broadcast %0 : vector<1x128xf32> to vector<4x128xf32>
    %6 = arith.subf %4, %5 : vector<4x128xf32>
    %7 = vector.broadcast %1 : vector<1x128xf32> to vector<4x128xf32>
    %8 = arith.divf %6, %7 : vector<4x128xf32>
    %cst = arith.constant -6.000000e+00 : f32
    %cst_9 = arith.constant 6.000000e+00 : f32
    %9 = vector.broadcast %cst : f32 to vector<4x128xf32>
    %10 = arith.maximumf %9, %8 : vector<4x128xf32>
    %11 = vector.broadcast %cst_9 : f32 to vector<4x128xf32>
    %12 = arith.minimumf %11, %10 : vector<4x128xf32>
    %c0_10 = arith.constant 0 : index
    %c0_11 = arith.constant 0 : index
    %13 = vector.load %arg2[%c0_10, %c0_11] : memref<4x128xi8, #tpu.memory_space<vmem>>, vector<4x128xi8>
    %c0_i8 = arith.constant 0 : i8
    %14 = vector.broadcast %c0_i8 : i8 to vector<4x128xi8>
    %15 = arith.cmpi ne, %13, %14 : vector<4x128xi8>
    %cst_12 = arith.constant 0.000000e+00 : f32
    %16 = vector.broadcast %cst_12 : f32 to vector<4x128xf32>
    %17 = arith.select %15, %12, %16 : vector<4x128xi1>, vector<4x128xf32>
    %c0_13 = arith.constant 0 : index
    %c0_14 = arith.constant 0 : index
    %18 = vector.load %arg13[%c0_13, %c0_14] : memref<4x128xf32, #tpu.memory_space<vmem>>, vector<4x128xf32>
    tpu.vector_store %arg13[%c0_13, %c0_14], %17 {strides = array<i32>} : memref<4x128xf32, #tpu.memory_space<vmem>>, vector<4x128xf32>,
    %c0_15 = arith.constant 0 : index
    %c0_16 = arith.constant 0 : index
    %19 = vector.load %arg3[%c0_15, %c0_16] : memref<4x128xf32, #tpu.memory_space<vmem>>, vector<4x128xf32>
    %20 = vector.broadcast %0 : vector<1x128xf32> to vector<4x128xf32>
    %21 = arith.subf %19, %20 : vector<4x128xf32>
    %22 = vector.broadcast %1 : vector<1x128xf32> to vector<4x128xf32>
    %23 = arith.divf %21, %22 : vector<4x128xf32>
    %cst_17 = arith.constant -6.000000e+00 : f32
    %cst_18 = arith.constant 6.000000e+00 : f32
    %24 = vector.broadcast %cst_17 : f32 to vector<4x128xf32>
    %25 = arith.maximumf %24, %23 : vector<4x128xf32>
    %26 = vector.broadcast %cst_18 : f32 to vector<4x128xf32>
    %27 = arith.minimumf %26, %25 : vector<4x128xf32>
    %c0_19 = arith.constant 0 : index
    %c0_20 = arith.constant 0 : index
    %28 = vector.load %arg4[%c0_19, %c0_20] : memref<4x128xi8, #tpu.memory_space<vmem>>, vector<4x128xi8>
    %c0_i8_21 = arith.constant 0 : i8
    %29 = vector.broadcast %c0_i8_21 : i8 to vector<4x128xi8>
    %30 = arith.cmpi ne, %28, %29 : vector<4x128xi8>
    %cst_22 = arith.constant 0.000000e+00 : f32
    %31 = vector.broadcast %cst_22 : f32 to vector<4x128xf32>
    %32 = arith.select %30, %27, %31 : vector<4x128xi1>, vector<4x128xf32>
    %c0_23 = arith.constant 0 : index
    %c0_24 = arith.constant 0 : index
    %33 = vector.load %arg14[%c0_23, %c0_24] : memref<4x128xf32, #tpu.memory_space<vmem>>, vector<4x128xf32>
    tpu.vector_store %arg14[%c0_23, %c0_24], %32 {strides = array<i32>} : memref<4x128xf32, #tpu.memory_space<vmem>>, vector<4x128xf32>,
    %c0_25 = arith.constant 0 : index
    %c0_26 = arith.constant 0 : index
    %34 = vector.load %arg5[%c0_25, %c0_26] : memref<1x128xf32, #tpu.memory_space<vmem>>, vector<1x128xf32>
    %35 = arith.subf %34, %2 : vector<1x128xf32>
    %36 = arith.divf %35, %3 : vector<1x128xf32>
    %cst_27 = arith.constant -6.000000e+00 : f32
    %cst_28 = arith.constant 6.000000e+00 : f32
    %37 = vector.broadcast %cst_27 : f32 to vector<1x128xf32>
    %38 = arith.maximumf %37, %36 : vector<1x128xf32>
    %39 = vector.broadcast %cst_28 : f32 to vector<1x128xf32>
    %40 = arith.minimumf %39, %38 : vector<1x128xf32>
    %c0_29 = arith.constant 0 : index
    %c0_30 = arith.constant 0 : index
    %41 = vector.load %arg6[%c0_29, %c0_30] : memref<1x128xi8, #tpu.memory_space<vmem>>, vector<1x128xi8>
    %c0_i8_31 = arith.constant 0 : i8
    %42 = vector.broadcast %c0_i8_31 : i8 to vector<1x128xi8>
    %43 = arith.cmpi ne, %41, %42 : vector<1x128xi8>
    %cst_32 = arith.constant 0.000000e+00 : f32
    %44 = vector.broadcast %cst_32 : f32 to vector<1x128xf32>
    %45 = arith.select %43, %40, %44 : vector<1x128xi1>, vector<1x128xf32>
    %c0_33 = arith.constant 0 : index
    %c0_34 = arith.constant 0 : index
    %46 = vector.load %arg15[%c0_33, %c0_34] : memref<1x128xf32, #tpu.memory_space<vmem>>, vector<1x128xf32>
    tpu.vector_store %arg15[%c0_33, %c0_34], %45 {strides = array<i32>} : memref<1x128xf32, #tpu.memory_space<vmem>>, vector<1x128xf32>,
    %c0_35 = arith.constant 0 : index
    %c0_36 = arith.constant 0 : index
    %47 = vector.load %arg7[%c0_35, %c0_36] : memref<1x128xf32, #tpu.memory_space<vmem>>, vector<1x128xf32>
    %48 = arith.subf %47, %2 : vector<1x128xf32>
    %49 = arith.divf %48, %3 : vector<1x128xf32>
    %cst_37 = arith.constant -6.000000e+00 : f32
    %cst_38 = arith.constant 6.000000e+00 : f32
    %50 = vector.broadcast %cst_37 : f32 to vector<1x128xf32>
    %51 = arith.maximumf %50, %49 : vector<1x128xf32>
    %52 = vector.broadcast %cst_38 : f32 to vector<1x128xf32>
    %53 = arith.minimumf %52, %51 : vector<1x128xf32>
    %c0_39 = arith.constant 0 : index
    %c0_40 = arith.constant 0 : index
    %54 = vector.load %arg8[%c0_39, %c0_40] : memref<1x128xi8, #tpu.memory_space<vmem>>, vector<1x128xi8>
    %c0_i8_41 = arith.constant 0 : i8
    %55 = vector.broadcast %c0_i8_41 : i8 to vector<1x128xi8>
    %56 = arith.cmpi ne, %54, %55 : vector<1x128xi8>
    %cst_42 = arith.constant 0.000000e+00 : f32
    %57 = vector.broadcast %cst_42 : f32 to vector<1x128xf32>
    %58 = arith.select %56, %53, %57 : vector<1x128xi1>, vector<1x128xf32>
    %c0_43 = arith.constant 0 : index
    %c0_44 = arith.constant 0 : index
    %59 = vector.load %arg16[%c0_43, %c0_44] : memref<1x128xf32, #tpu.memory_space<vmem>>, vector<1x128xf32>
    tpu.vector_store %arg16[%c0_43, %c0_44], %58 {strides = array<i32>} : memref<1x128xf32, #tpu.memory_space<vmem>>, vector<1x128xf32>,
    return
  }
  func.func @transform_0(%arg0: i32) -> (i32, i32) {
    %c0_i32 = arith.constant 0 : i32
    %c0_i32_0 = arith.constant 0 : i32
    return %arg0, %c0_i32 : i32, i32
  }
  func.func @transform_1(%arg0: i32) -> (i32, i32) {
    %c0_i32 = arith.constant 0 : i32
    %c0_i32_0 = arith.constant 0 : i32
    return %arg0, %c0_i32 : i32, i32
  }
  func.func @transform_2(%arg0: i32) -> (i32, i32) {
    %c0_i32 = arith.constant 0 : i32
    %c0_i32_0 = arith.constant 0 : i32
    return %arg0, %c0_i32 : i32, i32
  }
  func.func @transform_3(%arg0: i32) -> (i32, i32) {
    %c0_i32 = arith.constant 0 : i32
    %c0_i32_0 = arith.constant 0 : i32
    return %arg0, %c0_i32 : i32, i32
  }
  func.func @transform_4(%arg0: i32) -> (i32, i32) {
    %c0_i32 = arith.constant 0 : i32
    %c0_i32_0 = arith.constant 0 : i32
    return %arg0, %c0_i32 : i32, i32
  }
  func.func @transform_5(%arg0: i32) -> (i32, i32) {
    %c0_i32 = arith.constant 0 : i32
    %c0_i32_0 = arith.constant 0 : i32
    return %arg0, %c0_i32 : i32, i32
  }
  func.func @transform_6(%arg0: i32) -> (i32, i32) {
    %c0_i32 = arith.constant 0 : i32
    %c0_i32_0 = arith.constant 0 : i32
    return %arg0, %c0_i32 : i32, i32
  }
  func.func @transform_7(%arg0: i32) -> (i32, i32) {
    %c0_i32 = arith.constant 0 : i32
    %c0_i32_0 = arith.constant 0 : i32
    return %arg0, %c0_i32 : i32, i32
  }
  func.func @transform_8(%arg0: i32) -> (i32, i32) {
    %c0_i32 = arith.constant 0 : i32
    %c0_i32_0 = arith.constant 0 : i32
    %c0_i32_1 = arith.constant 0 : i32
    return %c0_i32, %c0_i32_0 : i32, i32
  }
  func.func @transform_9(%arg0: i32) -> (i32, i32) {
    %c0_i32 = arith.constant 0 : i32
    %c0_i32_0 = arith.constant 0 : i32
    %c0_i32_1 = arith.constant 0 : i32
    return %c0_i32, %c0_i32_0 : i32, i32
  }
  func.func @transform_10(%arg0: i32) -> (i32, i32) {
    %c0_i32 = arith.constant 0 : i32
    %c0_i32_0 = arith.constant 0 : i32
    %c0_i32_1 = arith.constant 0 : i32
    return %c0_i32, %c0_i32_0 : i32, i32
  }
  func.func @transform_11(%arg0: i32) -> (i32, i32) {
    %c0_i32 = arith.constant 0 : i32
    %c0_i32_0 = arith.constant 0 : i32
    %c0_i32_1 = arith.constant 0 : i32
    return %c0_i32, %c0_i32_0 : i32, i32
  }
  func.func @transform_12(%arg0: i32) -> (i32, i32) {
    %c0_i32 = arith.constant 0 : i32
    %c0_i32_0 = arith.constant 0 : i32
    return %arg0, %c0_i32 : i32, i32
  }
  func.func @transform_13(%arg0: i32) -> (i32, i32) {
    %c0_i32 = arith.constant 0 : i32
    %c0_i32_0 = arith.constant 0 : i32
    return %arg0, %c0_i32 : i32, i32
  }
  func.func @transform_14(%arg0: i32) -> (i32, i32) {
    %c0_i32 = arith.constant 0 : i32
    %c0_i32_0 = arith.constant 0 : i32
    return %arg0, %c0_i32 : i32, i32
  }
  func.func @transform_15(%arg0: i32) -> (i32, i32) {
    %c0_i32 = arith.constant 0 : i32
    %c0_i32_0 = arith.constant 0 : i32
    return %arg0, %c0_i32 : i32, i32
  }
}

</mosaic_0001>

<llo_original>
// kernel: tpu_custom_call.1
$region0: #{tpu_custom_call.1}
  #allocation0 [shape = 'u32[]', space=smem, size = 0x4, offset = 0x4, fixed_abs, tag = 'smem constant byte address 0x4 - core index']
  #allocation1 [shape = 'u32[144,128]{1,0:T(1,128)}', space=vmem, size = 0x12000, scoped, tag = 'internal scratch']
  %s0 = inlined_call_operand.hbm [shape: f32[4,128], index: 0, kind: input, shape index: {}]
  %s1 = inlined_call_operand.vmem [shape: s8[4,128], index: 1, kind: input, shape index: {}]
  %s2 = inlined_call_operand.vmem [shape: f32[4,128], index: 2, kind: input, shape index: {}]
  %s3 = inlined_call_operand.vmem [shape: s8[4,128], index: 3, kind: input, shape index: {}]
  %s4 = inlined_call_operand.vmem [shape: f32[1,128], index: 4, kind: input, shape index: {}]
  %s5 = inlined_call_operand.vmem [shape: s8[1,128], index: 5, kind: input, shape index: {}]
  %s6 = inlined_call_operand.vmem [shape: f32[1,128], index: 6, kind: input, shape index: {}]
  %s7 = inlined_call_operand.vmem [shape: s8[1,128], index: 7, kind: input, shape index: {}]
  %s8 = inlined_call_operand.vmem [shape: f32[1,128], index: 8, kind: input, shape index: {}]
  %s9 = inlined_call_operand.vmem [shape: f32[1,128], index: 9, kind: input, shape index: {}]
  %s10 = inlined_call_operand.vmem [shape: f32[1,128], index: 10, kind: input, shape index: {}]
  %s11 = inlined_call_operand.vmem [shape: f32[1,128], index: 11, kind: input, shape index: {}]
  %s12 = inlined_call_operand.hbm [shape: f32[4,128], index: 12, kind: output, shape index: {0}]
  %s13 = inlined_call_operand.hbm [shape: f32[4,128], index: 13, kind: output, shape index: {1}]
  %s14 = inlined_call_operand.hbm [shape: f32[1,128], index: 14, kind: output, shape index: {2}]
  %s15 = inlined_call_operand.hbm [shape: f32[1,128], index: 15, kind: output, shape index: {3}]
  %16 = xla_tuple %s12, %s13, %s14, %s15
  %s17 = sld [smem:[#allocation0]]
  $region86: #{tpu_custom_call.1} parent=0
    _
  %s19 = ssub.s32 1, %s17
  %s20 = scalar_select 0, %s19, %s17
  $region1: #{tpu_custom_call.1} parent=0
    #allocation2 [shape = 'u8[2048]{0}', space=vmem, size = 0x800, scoped, tag = 'input window, operand 0, single buffered']
    #allocation3 [shape = 's32[1]{0}', space=sflag, size = 0x4, scoped, tag = 'scoped memory for tpu_custom_call.1']
    #allocation4 [shape = 's32[1]{0}', space=sflag, size = 0x4, scoped, tag = 'scoped memory for tpu_custom_call.1']
    #allocation5 [shape = 'u8[2048]{0}', space=vmem, size = 0x800, scoped, tag = 'output window, operand 0, single buffered']
    #allocation6 [shape = 'u8[2048]{0}', space=vmem, size = 0x800, scoped, tag = 'output window, operand 1, single buffered']
    #allocation7 [shape = 's32[1]{0}', space=sflag, size = 0x4, scoped, tag = 'scoped memory for tpu_custom_call.1']
    #allocation8 [shape = 'u8[512]{0}', space=vmem, size = 0x400, scoped, tag = 'output window, operand 2, single buffered']
    #allocation9 [shape = 'u8[512]{0}', space=vmem, size = 0x400, scoped, tag = 'output window, operand 3, single buffered']
    #allocation10 [shape = 's32[1]{0}', space=sflag, size = 0x4, scoped, tag = 'scoped memory for tpu_custom_call.1']
    %21 = vsyncpa [#allocation3], 0
    %22 = vsyncpa [#allocation4], 0
    %23 = vsyncpa [#allocation7], 0
    %24 = vsyncpa [#allocation10], 0
    // Predicated region
    $region2: #{tpu_custom_call.1} parent=1 // pred_check
      _
    $region3: #{tpu_custom_call.1} parent=1 // pred_check_branch
      %26 = sbr.rel (0) target = $region5
    $region4: #{tpu_custom_call.1} parent=1 // pred_region
      %s28 = ssub.s32 64, 64
      %29 = vsyncadd [#allocation3], %s28
      %s31 = sshll.u32 [#allocation2], 4
      %s32 = int_to_ptr.vmem [resolvable:$true] %s31
      %34 = dma.hbm_to_vmem [thread:$0]  %s0, 64, %s32, [#allocation3]
    $region5: #{tpu_custom_call.1} parent=1 // pred_fallthru
      _
    // Predicated region
    $region6: #{tpu_custom_call.1} parent=1 // pred_check
      _
    $region7: #{tpu_custom_call.1} parent=1 // pred_check_branch
      %36 = sbr.rel (0) target = $region9
    $region8: #{tpu_custom_call.1} parent=1 // pred_region
      _
    $region9: #{tpu_custom_call.1} parent=1 // pred_fallthru
      _
    // Predicated region
    $region10: #{tpu_custom_call.1} parent=1 // pred_check
      _
    $region11: #{tpu_custom_call.1} parent=1 // pred_check_branch
      %38 = sbr.rel (0) target = $region13
    $region12: #{tpu_custom_call.1} parent=1 // pred_region
      _
    $region13: #{tpu_custom_call.1} parent=1 // pred_fallthru
      _
    // Predicated region
    $region14: #{tpu_custom_call.1} parent=1 // pred_check
      _
    $region15: #{tpu_custom_call.1} parent=1 // pred_check_branch
      %40 = sbr.rel (0) target = $region17
    $region16: #{tpu_custom_call.1} parent=1 // pred_region
      _
    $region17: #{tpu_custom_call.1} parent=1 // pred_fallthru
      _
    // Predicated region
    $region18: #{tpu_custom_call.1} parent=1 // pred_check
      _
    $region19: #{tpu_custom_call.1} parent=1 // pred_check_branch
      %42 = sbr.rel (0) target = $region21
    $region20: #{tpu_custom_call.1} parent=1 // pred_region
      _
    $region21: #{tpu_custom_call.1} parent=1 // pred_fallthru
      _
    // Predicated region
    $region22: #{tpu_custom_call.1} parent=1 // pred_check
      _
    $region23: #{tpu_custom_call.1} parent=1 // pred_check_branch
      %44 = sbr.rel (0) target = $region25
    $region24: #{tpu_custom_call.1} parent=1 // pred_region
      _
    $region25: #{tpu_custom_call.1} parent=1 // pred_fallthru
      _
    // Predicated region
    $region26: #{tpu_custom_call.1} parent=1 // pred_check
      _
    $region27: #{tpu_custom_call.1} parent=1 // pred_check_branch
      %46 = sbr.rel (0) target = $region29
    $region28: #{tpu_custom_call.1} parent=1 // pred_region
      _
    $region29: #{tpu_custom_call.1} parent=1 // pred_fallthru
      _
    // Predicated region
    $region30: #{tpu_custom_call.1} parent=1 // pred_check
      _
    $region31: #{tpu_custom_call.1} parent=1 // pred_check_branch
      %48 = sbr.rel (0) target = $region33
    $region32: #{tpu_custom_call.1} parent=1 // pred_region
      _
    $region33: #{tpu_custom_call.1} parent=1 // pred_fallthru
      _
    // Predicated region
    $region34: #{tpu_custom_call.1} parent=1 // pred_check
      _
    $region35: #{tpu_custom_call.1} parent=1 // pred_check_branch
      %50 = sbr.rel (0) target = $region37
    $region36: #{tpu_custom_call.1} parent=1 // pred_region
      _
    $region37: #{tpu_custom_call.1} parent=1 // pred_fallthru
      _
    // Predicated region
    $region38: #{tpu_custom_call.1} parent=1 // pred_check
      _
    $region39: #{tpu_custom_call.1} parent=1 // pred_check_branch
      %52 = sbr.rel (0) target = $region41
    $region40: #{tpu_custom_call.1} parent=1 // pred_region
      _
    $region41: #{tpu_custom_call.1} parent=1 // pred_fallthru
      _
    // Predicated region
    $region42: #{tpu_custom_call.1} parent=1 // pred_check
      _
    $region43: #{tpu_custom_call.1} parent=1 // pred_check_branch
      %54 = sbr.rel (0) target = $region45
    $region44: #{tpu_custom_call.1} parent=1 // pred_region
      _
    $region45: #{tpu_custom_call.1} parent=1 // pred_fallthru
      _
    // Predicated region
    $region46: #{tpu_custom_call.1} parent=1 // pred_check
      _
    $region47: #{tpu_custom_call.1} parent=1 // pred_check_branch
      %56 = sbr.rel (0) target = $region49
    $region48: #{tpu_custom_call.1} parent=1 // pred_region
      _
    $region49: #{tpu_custom_call.1} parent=1 // pred_fallthru
      _
    // Predicated region
    $region50: #{tpu_custom_call.1} parent=1 // pred_check
      _
    $region51: #{tpu_custom_call.1} parent=1 // pred_check_branch
      %58 = sbr.rel (0) target = $region53
    $region52: #{tpu_custom_call.1} parent=1 // pred_region
      %59 = dma.done [#allocation3], 64
    $region53: #{tpu_custom_call.1} parent=1 // pred_fallthru
      _
    %v62 = vld [vmem:[%s8] sm:$0x1]
    %v63 = vld [vmem:[%s9] sm:$0x1]
    %v64 = vld [vmem:[%s10] sm:$0x1]
    %v65 = vld [vmem:[%s11] sm:$0x1]
    %v66 = vld [vmem:[#allocation2] sm:$0xf]
    %v68 = vlaneseq
    %v69 = vshrl.u32 %v68, 7
    %v70 = vsub.s32 0, %v69
    %v71 = vrot.slane %v62, %v70
    %v73 = vsub.f32 %v66, %v71
    %v75 = vlaneseq
    %v76 = vshrl.u32 %v75, 7
    %v77 = vsub.s32 0, %v76
    %v78 = vrot.slane %v63, %v77
    %v80 = vrcp.pop %v78
    %v81 = vmul.f32 %v73, %v80
    %v82 = vmax.f32 %v81, -6.0
    %v83 = vmin.f32 %v82, 6.0
    %v84 = vld [vmem:[%s1] sm:$0x1]
    %vm85 = vnez %v84
    %v86 = vsel %vm85, 16843009, 0
    %v87 = vunpack.c.0.s8 %v86
    %vm88 = vcmp.ne.s32.totalorder %v87, 0
    %v89 = vsel %vm88, %v83, 0.0
    %90 = vst [vmem:[#allocation5] sm:$0xf] %v89
    %v91 = vld [vmem:[%s2] sm:$0xf]
    %v92 = vsub.f32 %v91, %v71
    %v93 = vmul.f32 %v92, %v80
    %v94 = vmax.f32 %v93, -6.0
    %v95 = vmin.f32 %v94, 6.0
    %v96 = vld [vmem:[%s3] sm:$0x1]
    %vm97 = vnez %v96
    %v98 = vsel %vm97, 16843009, 0
    %v99 = vunpack.c.0.s8 %v98
    %vm100 = vcmp.ne.s32.totalorder %v99, 0
    %v101 = vsel %vm100, %v95, 0.0
    %102 = vst [vmem:[#allocation6] sm:$0xf] %v101
    %v103 = vld [vmem:[%s4] sm:$0x1]
    %v104 = vsub.f32 %v103, %v64
    %v105 = vrcp.pop %v65
    %v106 = vmul.f32 %v104, %v105
    %v107 = vmax.f32 %v106, -6.0
    %v108 = vmin.f32 %v107, 6.0
    %v109 = vld [vmem:[%s5] sm:$0x1]
    %vm110 = vnez %v109
    %v111 = vsel %vm110, 16843009, 0
    %v112 = vunpack.c.0.s8 %v111
    %vm113 = vcmp.ne.s32.totalorder %v112, 0
    %v114 = vsel %vm113, %v108, 0.0
    %115 = vst [vmem:[#allocation8] sm:$0x1] %v114
    %v116 = vld [vmem:[%s6] sm:$0x1]
    %v117 = vsub.f32 %v116, %v64
    %v118 = vmul.f32 %v117, %v105
    %v119 = vmax.f32 %v118, -6.0
    %v120 = vmin.f32 %v119, 6.0
    %v121 = vld [vmem:[%s7] sm:$0x1]
    %vm122 = vnez %v121
    %v123 = vsel %vm122, 16843009, 0
    %v124 = vunpack.c.0.s8 %v123
    %vm125 = vcmp.ne.s32.totalorder %v124, 0
    %v126 = vsel %vm125, %v120, 0.0
    %127 = vst [vmem:[#allocation9] sm:$0x1] %v126
    // Predicated region
    $region54: #{tpu_custom_call.1} parent=1 // pred_check
      _
    $region55: #{tpu_custom_call.1} parent=1 // pred_check_branch
      %129 = sbr.rel (0) target = $region57
    $region56: #{tpu_custom_call.1} parent=1 // pred_region
      %s131 = ssub.s32 64, 64
      %132 = vsyncadd [#allocation4], %s131
      %s134 = sshll.u32 [#allocation5], 4
      %s135 = int_to_ptr.vmem [resolvable:$true] %s134
      %137 = dma.vmem_to_hbm [thread:$0]  %s135, 64, %s12, [#allocation4]
    $region57: #{tpu_custom_call.1} parent=1 // pred_fallthru
      _
    // Predicated region
    $region58: #{tpu_custom_call.1} parent=1 // pred_check
      _
    $region59: #{tpu_custom_call.1} parent=1 // pred_check_branch
      %139 = sbr.rel (0) target = $region61
    $region60: #{tpu_custom_call.1} parent=1 // pred_region
      %s141 = ssub.s32 64, 64
      %142 = vsyncadd [#allocation7], %s141
      %s144 = sshll.u32 [#allocation6], 4
      %s145 = int_to_ptr.vmem [resolvable:$true] %s144
      %147 = dma.vmem_to_hbm [thread:$0]  %s145, 64, %s13, [#allocation7]
    $region61: #{tpu_custom_call.1} parent=1 // pred_fallthru
      _
    // Predicated region
    $region62: #{tpu_custom_call.1} parent=1 // pred_check
      _
    $region63: #{tpu_custom_call.1} parent=1 // pred_check_branch
      %149 = sbr.rel (0) target = $region65
    $region64: #{tpu_custom_call.1} parent=1 // pred_region
      %s151 = ssub.s32 16, 16
      %152 = vsyncadd [#allocation7], %s151
      %s154 = sshll.u32 [#allocation8], 4
      %s155 = int_to_ptr.vmem [resolvable:$true] %s154
      %157 = dma.vmem_to_hbm [thread:$0]  %s155, 16, %s14, [#allocation7]
    $region65: #{tpu_custom_call.1} parent=1 // pred_fallthru
      _
    // Predicated region
    $region66: #{tpu_custom_call.1} parent=1 // pred_check
      _
    $region67: #{tpu_custom_call.1} parent=1 // pred_check_branch
      %159 = sbr.rel (0) target = $region69
    $region68: #{tpu_custom_call.1} parent=1 // pred_region
      %s161 = ssub.s32 16, 16
      %162 = vsyncadd [#allocation10], %s161
      %s164 = sshll.u32 [#allocation9], 4
      %s165 = int_to_ptr.vmem [resolvable:$true] %s164
      %167 = dma.vmem_to_hbm [thread:$0]  %s165, 16, %s15, [#allocation10]
    $region69: #{tpu_custom_call.1} parent=1 // pred_fallthru
      _
    // Predicated region
    $region70: #{tpu_custom_call.1} parent=1 // pred_check
      _
    $region71: #{tpu_custom_call.1} parent=1 // pred_check_branch
      %169 = sbr.rel (0) target = $region73
    $region72: #{tpu_custom_call.1} parent=1 // pred_region
      %170 = dma.done [#allocation4], 64
    $region73: #{tpu_custom_call.1} parent=1 // pred_fallthru
      _
    // Predicated region
    $region74: #{tpu_custom_call.1} parent=1 // pred_check
      _
    $region75: #{tpu_custom_call.1} parent=1 // pred_check_branch
      %172 = sbr.rel (0) target = $region77
    $region76: #{tpu_custom_call.1} parent=1 // pred_region
      %173 = dma.done [#allocation7], 64
    $region77: #{tpu_custom_call.1} parent=1 // pred_fallthru
      _
    // Predicated region
    $region78: #{tpu_custom_call.1} parent=1 // pred_check
      _
    $region79: #{tpu_custom_call.1} parent=1 // pred_check_branch
      %175 = sbr.rel (0) target = $region81
    $region80: #{tpu_custom_call.1} parent=1 // pred_region
      %176 = dma.done [#allocation7], 16
    $region81: #{tpu_custom_call.1} parent=1 // pred_fallthru
      _
    // Predicated region
    $region82: #{tpu_custom_call.1} parent=1 // pred_check
      _
    $region83: #{tpu_custom_call.1} parent=1 // pred_check_branch
      %178 = sbr.rel (0) target = $region85
    $region84: #{tpu_custom_call.1} parent=1 // pred_region
      %179 = dma.done [#allocation10], 16
    $region85: #{tpu_custom_call.1} parent=1 // pred_fallthru
      _
    %180 = vsyncpa [#allocation3], 1
    %181 = vsyncpa [#allocation4], 1
    %182 = vsyncpa [#allocation7], 1
    %183 = vsyncpa [#allocation10], 1

</llo_original>
